<compile_context>
chip_gen: v7x
topology: tpu7x:2x2x1
jax: 0.10.0
libtpu: 0.0.40
codegen_flags: <defaults>
</compile_context>

<pallas_src>
import functools
import math

import jax
import jax.numpy as jnp
from jax import lax
from jax.experimental import pallas as pl
from jax.experimental.pallas import tpu as pltpu

BF16 = jnp.bfloat16
F32 = jnp.float32


# ----------------------------- helpers -----------------------------

def _pick_tile(dim, candidates):
    """First (largest preferred) tile that divides dim, else the full dim (always legal)."""
    for c in candidates:
        if dim % c == 0:
            return c
    return dim


def _sigmoid(x):
    return 1.0 / (1.0 + jnp.exp(-x))


# ----------------------------- tiled matmul -----------------------------

def _matmul_kernel(act, a_ref, b_ref, o_ref, acc_ref):
    @pl.when(pl.program_id(2) == 0)
    def _():
        acc_ref[...] = jnp.zeros_like(acc_ref)

    acc_ref[...] += jnp.dot(a_ref[...], b_ref[...],
                            preferred_element_type=jnp.float32)

    @pl.when(pl.program_id(2) == pl.num_programs(2) - 1)
    def _():
        y = acc_ref[...]
        if act == 'relu2':
            y = jnp.square(jnp.maximum(y, 0.0))
        o_ref[...] = y.astype(o_ref.dtype)


def pl_matmul(a, b, act='none', out_dtype=BF16):
    """(M, K) @ (K, N): bf16 operands, f32 accumulate, bf16 output, tiled + pipelined."""
    M, K = a.shape
    _, N = b.shape
    tm = _pick_tile(M, (512, 256, 128))
    tn = _pick_tile(N, (512, 256, 128))
    tk = _pick_tile(K, (1024, 512, 256, 128))
    return pl.pallas_call(
        functools.partial(_matmul_kernel, act),
        out_shape=jax.ShapeDtypeStruct((M, N), out_dtype),
        grid=(M // tm, N // tn, K // tk),
        in_specs=[pl.BlockSpec((tm, tk), lambda i, j, k: (i, k)),
                  pl.BlockSpec((tk, tn), lambda i, j, k: (k, j))],
        out_specs=pl.BlockSpec((tm, tn), lambda i, j, k: (i, j)),
        scratch_shapes=[pltpu.VMEM((tm, tn), jnp.float32)],
        compiler_params=pltpu.CompilerParams(
            dimension_semantics=("parallel", "parallel", "arbitrary")),
    )(a.astype(BF16), b.astype(BF16))


# ----------------------------- fused LoRA / gate -----------------------------

def _lora_kernel(mid_act, out_act, x_ref, w1_ref, w2_ref, b_ref, o_ref):
    h = jnp.dot(x_ref[...], w1_ref[...], preferred_element_type=jnp.float32)
    if mid_act == 'tanh':
        h = jnp.tanh(h)
    elif mid_act == 'sigmoid':
        h = _sigmoid(h)
    y = jnp.dot(h.astype(w2_ref.dtype), w2_ref[...],
                preferred_element_type=jnp.float32)
    y = y + b_ref[...]
    if out_act == 'sigmoid':
        y = _sigmoid(y)
    elif out_act == 'softclamp':
        # -softplus(-y) - 0.5  ==  -(max(-y, 0) + log(1 + exp(-|y|))) - 0.5
        y = -(jnp.maximum(-y, 0.0) + jnp.log(1.0 + jnp.exp(-jnp.abs(y)))) - 0.5
    o_ref[...] = y.astype(o_ref.dtype)


def pl_lora(x2d, w1, w2, mid_act='none', bias=None, out_act='none', out_dtype=BF16):
    """Fused x @ w1 -> mid_act -> @ w2 -> + bias -> out_act (intermediate stays in VMEM)."""
    M, K = x2d.shape
    D1 = w1.shape[1]
    D2 = w2.shape[1]
    if bias is None:
        bias = jnp.zeros((1, D2), jnp.float32)
    else:
        bias = bias.reshape(1, D2).astype(jnp.float32)
    tm = _pick_tile(M, (512, 256, 128))
    return pl.pallas_call(
        functools.partial(_lora_kernel, mid_act, out_act),
        out_shape=jax.ShapeDtypeStruct((M, D2), out_dtype),
        grid=(M // tm,),
        in_specs=[pl.BlockSpec((tm, K), lambda i: (i, 0)),
                  pl.BlockSpec((K, D1), lambda i: (0, 0)),
                  pl.BlockSpec((D1, D2), lambda i: (0, 0)),
                  pl.BlockSpec((1, D2), lambda i: (0, 0))],
        out_specs=pl.BlockSpec((tm, D2), lambda i: (i, 0)),
        compiler_params=pltpu.CompilerParams(dimension_semantics=("parallel",)),
    )(x2d.astype(BF16), w1.astype(BF16), w2.astype(BF16), bias)


# ----------------------------- fused token-shift mixes -----------------------------

def _mix_kernel(n_mix, x_ref, xs_ref, m_ref, o_ref):
    x = x_ref[...].astype(jnp.float32)
    d = xs_ref[...].astype(jnp.float32) - x
    m = m_ref[...].astype(jnp.float32)                 # (n_mix, C)
    for s in range(n_mix):
        o_ref[s] = (x + d * m[s:s + 1, :]).astype(o_ref.dtype)


def pl_token_mix(x2d, xsh2d, mix_stack):
    """out[s] = x + (shift(x) - x) * mix[s]; x read once, six lane-dense writes."""
    M, C = x2d.shape
    S = mix_stack.shape[0]
    tm = _pick_tile(M, (128,))
    return pl.pallas_call(
        functools.partial(_mix_kernel, S),
        out_shape=jax.ShapeDtypeStruct((S, M, C), BF16),
        grid=(M // tm,),
        in_specs=[pl.BlockSpec((tm, C), lambda i: (i, 0)),
                  pl.BlockSpec((tm, C), lambda i: (i, 0)),
                  pl.BlockSpec((S, C), lambda i: (0, 0))],
        out_specs=pl.BlockSpec((S, tm, C), lambda i: (0, i, 0)),
        compiler_params=pltpu.CompilerParams(dimension_semantics=("parallel",)),
    )(x2d.astype(BF16), xsh2d.astype(BF16), mix_stack.astype(jnp.float32))


# ----------------------------- LayerNorm / GroupNorm -----------------------------

def _ln_kernel(eps, x_ref, g_ref, b_ref, y_ref):
    x = x_ref[...].astype(jnp.float32)
    mean = jnp.mean(x, axis=-1, keepdims=True)
    xc = x - mean
    var = jnp.mean(xc * xc, axis=-1, keepdims=True)
    y_ref[...] = (xc * lax.rsqrt(var + eps) * g_ref[...] + b_ref[...]).astype(y_ref.dtype)


def pl_layernorm(x2d, gamma, beta, eps=1e-5):
    M, D = x2d.shape
    tm = _pick_tile(M, (256, 512, 128))
    return pl.pallas_call(
        functools.partial(_ln_kernel, eps),
        out_shape=jax.ShapeDtypeStruct((M, D), BF16),
        grid=(M // tm,),
        in_specs=[pl.BlockSpec((tm, D), lambda i: (i, 0)),
                  pl.BlockSpec((1, D), lambda i: (0, 0)),
                  pl.BlockSpec((1, D), lambda i: (0, 0))],
        out_specs=pl.BlockSpec((tm, D), lambda i: (i, 0)),
        compiler_params=pltpu.CompilerParams(dimension_semantics=("parallel",)),
    )(x2d.astype(BF16),
      gamma.reshape(1, D).astype(jnp.float32),
      beta.reshape(1, D).astype(jnp.float32))


def _add_ln_kernel(eps, x_ref, r_ref, g_ref, b_ref, y_ref, s_ref):
    x = x_ref[...].astype(jnp.float32) + r_ref[...].astype(jnp.float32)
    s_ref[...] = x.astype(s_ref.dtype)
    mean = jnp.mean(x, axis=-1, keepdims=True)
    xc = x - mean
    var = jnp.mean(xc * xc, axis=-1, keepdims=True)
    y_ref[...] = (xc * lax.rsqrt(var + eps) * g_ref[...] + b_ref[...]).astype(y_ref.dtype)


def pl_add_layernorm(x2d, res2d, gamma, beta, eps=1e-5):
    """Fused residual add + LayerNorm: returns (LN(x + res), x + res)."""
    M, D = x2d.shape
    tm = _pick_tile(M, (256, 512, 128))
    spec = pl.BlockSpec((tm, D), lambda i: (i, 0))
    return pl.pallas_call(
        functools.partial(_add_ln_kernel, eps),
        out_shape=(jax.ShapeDtypeStruct((M, D), BF16),
                   jax.ShapeDtypeStruct((M, D), BF16)),
        grid=(M // tm,),
        in_specs=[spec, spec,
                  pl.BlockSpec((1, D), lambda i: (0, 0)),
                  pl.BlockSpec((1, D), lambda i: (0, 0))],
        out_specs=(spec, spec),
        compiler_params=pltpu.CompilerParams(dimension_semantics=("parallel",)),
    )(x2d.astype(BF16), res2d.astype(BF16),
      gamma.reshape(1, D).astype(jnp.float32),
      beta.reshape(1, D).astype(jnp.float32))


def _gn_kernel(eps, n_groups, x_ref, g_ref, b_ref, o_ref):
    x = x_ref[...].astype(jnp.float32)
    C = x.shape[-1]
    N = C // n_groups
    # group indicator (C, H): lane-dense per-group reductions via small matmuls.
    cidx = lax.broadcasted_iota(jnp.int32, (C, n_groups), 0) // N
    hidx = lax.broadcasted_iota(jnp.int32, (C, n_groups), 1)
    seg = (cidx == hidx).astype(jnp.float32)
    inv_n = 1.0 / float(N)
    nt = (((1,), (1,)), ((), ()))
    mean = jnp.dot(x, seg, preferred_element_type=jnp.float32) * inv_n          # (M, H)
    mean_b = lax.dot_general(mean, seg, nt, preferred_element_type=jnp.float32)  # (M, C)
    xc = x - mean_b                                                              # centered two-pass
    var = jnp.dot(xc * xc, seg, preferred_element_type=jnp.float32) * inv_n
    rstd_b = lax.dot_general(lax.rsqrt(var + eps), seg, nt,
                             preferred_element_type=jnp.float32)
    o_ref[...] = (xc * rstd_b * g_ref[...] + b_ref[...]).astype(o_ref.dtype)


def pl_groupnorm(x2d, weight, bias, n_groups, eps):
    M, C = x2d.shape
    tm = _pick_tile(M, (256, 512, 128))
    return pl.pallas_call(
        functools.partial(_gn_kernel, eps, n_groups),
        out_shape=jax.ShapeDtypeStruct((M, C), BF16),
        grid=(M // tm,),
        in_specs=[pl.BlockSpec((tm, C), lambda i: (i, 0)),
                  pl.BlockSpec((1, C), lambda i: (0, 0)),
                  pl.BlockSpec((1, C), lambda i: (0, 0))],
        out_specs=pl.BlockSpec((tm, C), lambda i: (i, 0)),
        compiler_params=pltpu.CompilerParams(dimension_semantics=("parallel",)),
    )(x2d.astype(BF16),
      weight.reshape(1, C).astype(jnp.float32),
      bias.reshape(1, C).astype(jnp.float32))


# ----------------------------- chunked WKV7 -----------------------------
#
# Per head: S_t = S_{t-1} diag(w_t) + (S_{t-1} a_t) b_t^T + v_t k_t^T ,  o_t = S_t r_t
# Within a chunk of length L, with W_t = prod_{s<=t} w_s,
#   a_hat_t = a_t * W_{t-1},  b_bar_t = b_t / W_t,  k_bar_t = k_t / W_t,  r_hat_t = r_t * W_t
#   M  = strict_tril(a_hat @ b_bar^T), Mk = strict_tril(a_hat @ k_bar^T)
#   Z  = (I - M)^{-1} (a_hat @ S0^T + Mk @ V)                (all z_t = S_{t-1} a_t)
#   O  = r_hat @ S0^T + tril(r_hat @ b_bar^T) @ Z + tril(r_hat @ k_bar^T) @ V
#   S_L = S0 * W_L + Z^T @ (b_bar * W_L) + V^T @ (k_bar * W_L)

def _wkv7_chunk_kernel(G, N, r_ref, w_ref, k_ref, v_ref, a_ref, b_ref,
                       o_ref, state_ref):
    @pl.when(pl.program_id(2) == 0)
    def _():
        state_ref[...] = jnp.zeros_like(state_ref)

    f32 = jnp.float32
    bf16 = jnp.bfloat16
    L = r_ref.shape[1]

    row = lax.broadcasted_iota(jnp.int32, (L, L), 0)
    col = lax.broadcasted_iota(jnp.int32, (L, L), 1)
    tril_inc = (row >= col).astype(f32)
    tril_str = (row > col).astype(f32)

    r_all = r_ref[0].astype(f32)
    k_all = k_ref[0].astype(f32)
    v_all = v_ref[0]                       # bf16 matmul operand
    a_all = a_ref[0].astype(f32)
    b_all = b_ref[0].astype(f32)

    # hoisted decay: log(decay) = -exp(w).  Inclusive prefix sum over time done with
    # roll-add doubling (VPU/XLU) so the MXU stays free for the triangular matmuls.
    logw = -jnp.exp(w_ref[0])
    cw = logw
    rowi = lax.broadcasted_iota(jnp.int32, logw.shape, 0)
    shift = 1
    while shift < L:
        cw = cw + jnp.where(rowi >= shift, pltpu.roll(cw, shift, axis=0), 0.0)
        shift *= 2

    dot = lambda x, y: jnp.dot(x, y, preferred_element_type=f32)
    dot_nt = lambda x, y: lax.dot_general(
        x, y, (((1,), (1,)), ((), ())), preferred_element_type=f32)
    dot_tn = lambda x, y: lax.dot_general(
        x, y, (((0,), (0,)), ((), ())), preferred_element_type=f32)

    n_solve = max(1, int(math.ceil(math.log2(max(L, 2)))))

    outs = []
    for g in range(G):
        sl = slice(g * N, (g + 1) * N)
        cwg = cw[:, sl]
        lwg = logw[:, sl]
        Wi = jnp.exp(cwg)                  # W_t        (<= 1)
        Wm = jnp.exp(cwg - lwg)            # W_{t-1}
        Winv = jnp.exp(-cwg)               # 1 / W_t    (bounded in f32 for L <= 64)

        a_hat = (a_all[:, sl] * Wm).astype(bf16)
        r_hat = (r_all[:, sl] * Wi).astype(bf16)
        b_bar_f = b_all[:, sl] * Winv
        k_bar_f = k_all[:, sl] * Winv
        b_bar = b_bar_f.astype(bf16)
        k_bar = k_bar_f.astype(bf16)
        vg = v_all[:, sl]

        # masked triangular couplings (bf16 operands, f32 accumulate; products are O(1)).
        M_ab = tril_str * dot_nt(a_hat, b_bar)
        M_ak = tril_str * dot_nt(a_hat, k_bar)
        T_rb = tril_inc * dot_nt(r_hat, b_bar)
        T_rk = tril_inc * dot_nt(r_hat, k_bar)

        S0 = state_ref[g]                  # (N, N) f32
        S0b = S0.astype(bf16)

        # Z = (I - M_ab)^{-1} rhs via Neumann doubling applied directly to the RHS
        # (never materializes the inverse: (L,L)@(L,N) applies instead of (L,L)@(L,L)).
        Z = dot_nt(a_hat, S0b) + dot(M_ak.astype(bf16), vg)
        msq = M_ab
        for it in range(n_solve):
            Z = Z + dot(msq.astype(bf16), Z.astype(bf16))
            if it + 1 < n_solve:
                msq = dot(msq.astype(bf16), msq.astype(bf16))

        Og = (dot_nt(r_hat, S0b)
              + dot(T_rb.astype(bf16), Z.astype(bf16))
              + dot(T_rk.astype(bf16), vg))
        outs.append(Og)

        WL = Wi[L - 1:L, :]                # (1, N)
        bw = (b_bar_f * WL).astype(bf16)   # bounded (<= |b|)
        kw = (k_bar_f * WL).astype(bf16)
        state_ref[g] = S0 * WL + dot_tn(Z.astype(bf16), bw) + dot_tn(vg, kw)

    # single lane-dense store of the whole (L, G*N) chunk output.
    if G == 1:
        o_ref[0] = outs[0].astype(o_ref.dtype)
    else:
        o_ref[0] = jnp.concatenate(outs, axis=-1).astype(o_ref.dtype)


def pl_wkv7(r, w, k, v, a, b, H, N):
    """RWKV7_OP: (B, T, C) inputs -> (B, T, C) bf16 output, zero initial state.

    Grid = (batch, head-group, time-chunk): the channel axis is tiled directly by the
    BlockSpec index_map (no HBM regroup/transpose); head groups are packed so the lane
    width G*N is a multiple of 128 (or the full channel dim).
    """
    B, T, C = r.shape
    G = H
    for g in range(1, H + 1):
        if H % g == 0 and (g * N) % 128 == 0:
            G = g
            break
    GN = G * N
    HG = H // G

    # chunk length: <= 64 keeps the masked-decay products well inside f32 range.
    # TODO(synk): L=128/256 would fill the 256-wide MXU better but needs an in-chunk
    # decay rescale to avoid exp overflow in the masked upper triangle.
    L = T
    for c in (64, 32, 16):
        if T % c == 0:
            L = c
            break

    spec = pl.BlockSpec((1, L, GN), lambda bb, hh, tt: (bb, tt, hh))
    return pl.pallas_call(
        functools.partial(_wkv7_chunk_kernel, G, N),
        out_shape=jax.ShapeDtypeStruct((B, T, C), BF16),
        grid=(B, HG, T // L),
        in_specs=[spec] * 6,
        out_specs=spec,
        scratch_shapes=[pltpu.VMEM((G, N, N), jnp.float32)],
        compiler_params=pltpu.CompilerParams(
            dimension_semantics=("parallel", "parallel", "arbitrary")),
    )(r.astype(BF16), w.astype(jnp.float32), k.astype(BF16),
      v.astype(BF16), a.astype(BF16), b.astype(BF16))


# ----------------------------- model glue (plain JAX) -----------------------------

def time_shift(x):
    # nn.ZeroPad2d((0, 0, 1, -1)): shift tokens right by one, zero-pad front.
    return jnp.concatenate([jnp.zeros_like(x[:, :1]), x[:, :-1]], axis=1)


def tmix_forward(p, layer_id, x, v_first, H, N):
    B, T, C = x.shape
    M = B * T
    xsh = time_shift(x)
    mix_stack = jnp.concatenate(
        [p['x_r'], p['x_w'], p['x_k'], p['x_v'], p['x_a'], p['x_g']], axis=0
    ).reshape(6, C)
    mixed = pl_token_mix(x.reshape(M, C), xsh.reshape(M, C), mix_stack)   # (6, M, C) bf16
    xr, xw, xk, xv, xa, xg = (mixed[i] for i in range(6))

    # TODO(synk): Wr/Wk/Wv cannot be stacked into one matmul: different token-shift mixes.
    r = pl_matmul(xr, p['Wr'])
    k = pl_matmul(xk, p['Wk'])
    v = pl_matmul(xv, p['Wv'])

    # fused LoRA epilogues (soft-clamp / sigmoid applied in-kernel, no extra HBM pass).
    w = pl_lora(xw, p['w1'], p['w2'], mid_act='tanh', bias=p['w0'],
                out_act='softclamp', out_dtype=jnp.float32)               # <= -0.5
    a = pl_lora(xa, p['a1'], p['a2'], mid_act='none', bias=p['a0'], out_act='sigmoid')

    if layer_id == 0:
        v_first = v
    else:
        vgate = pl_lora(xv, p['v1'], p['v2'], mid_act='none', bias=p['v0'],
                        out_act='sigmoid')
        v = (v.astype(jnp.float32)
             + (v_first.astype(jnp.float32) - v.astype(jnp.float32))
             * vgate.astype(jnp.float32)).astype(BF16)

    g = pl_lora(xg, p['g1'], p['g2'], mid_act='sigmoid')

    a_f = a.astype(jnp.float32)
    k_f = k.astype(jnp.float32)
    kk = k_f * p['k_k'].reshape(1, C)
    kk_h = kk.reshape(M, H, N)
    kk_h = kk_h / jnp.maximum(
        jnp.sqrt(jnp.sum(kk_h * kk_h, axis=-1, keepdims=True)), 1e-12)
    kk = kk_h.reshape(M, C)
    k2 = k_f * (1.0 + (a_f - 1.0) * p['k_a'].reshape(1, C))

    shp = (B, T, C)
    out = pl_wkv7(r.reshape(shp), w.reshape(shp), k2.reshape(shp), v.reshape(shp),
                  (-kk).reshape(shp), (kk * a_f).reshape(shp), H, N)

    out = pl_groupnorm(out.reshape(M, C), p['ln_x_w'], p['ln_x_b'], H, eps=64e-5)

    rk = jnp.sum(r.astype(jnp.float32).reshape(M, H, N) * k2.reshape(M, H, N)
                 * p['r_k'].reshape(1, H, N), axis=-1, keepdims=True)
    out = out.astype(jnp.float32) + (rk * v.astype(jnp.float32).reshape(M, H, N)).reshape(M, C)

    out = pl_matmul((out * g.astype(jnp.float32)).astype(BF16), p['Wo'])
    return out.reshape(B, T, C), v_first


def cmix_forward(p, x):
    B, T, C = x.shape
    xsh = time_shift(x)
    kx = (x.astype(jnp.float32)
          + (xsh.astype(jnp.float32) - x.astype(jnp.float32)) * p['x_k'].reshape(1, 1, C))
    kh = pl_matmul(kx.reshape(B * T, C).astype(BF16), p['Wk'], act='relu2')   # relu^2 fused
    return pl_matmul(kh, p['Wv']).reshape(B, T, C)


def block_forward(p, layer_id, x, pending, v_first, H, N):
    """`pending` is the previous block's FFN output; its residual add is fused into ln1."""
    B, T, C = x.shape
    M = B * T
    x2 = x.reshape(M, C)
    if layer_id == 0:
        x2 = pl_layernorm(x2, p['ln0_w'], p['ln0_b'])
        xn1 = pl_layernorm(x2, p['ln1_w'], p['ln1_b'])
    else:
        xn1, x2 = pl_add_layernorm(x2, pending.reshape(M, C), p['ln1_w'], p['ln1_b'])
    att, v_first = tmix_forward(p['att'], layer_id, xn1.reshape(B, T, C), v_first, H, N)
    xn2, x2 = pl_add_layernorm(x2, att.reshape(M, C), p['ln2_w'], p['ln2_b'])
    ffn = cmix_forward(p['ffn'], xn2.reshape(B, T, C))
    return x2.reshape(B, T, C), ffn, v_first


def rwkv_forward(params, idx, H, N):
    x = params['emb'][idx]                                   # (B, T, C) bf16
    B, T, C = x.shape
    v_first = None
    pending = None
    for i, bp in enumerate(params['blocks']):
        x, pending, v_first = block_forward(bp, i, x, pending, v_first, H, N)
    x2 = x.reshape(B * T, C)
    if pending is not None:
        xn, _ = pl_add_layernorm(x2, pending.reshape(B * T, C),
                                 params['ln_out_w'], params['ln_out_b'])
    else:
        xn = pl_layernorm(x2, params['ln_out_w'], params['ln_out_b'])
    logits = pl_matmul(xn, params['head']).reshape(B, T, -1)
    return logits


# ----------------------------- deterministic init -----------------------------

def init_params(key, n_layer, vocab, C, H, N, dim_ffn, d_lora=16):
    keys = iter(jax.random.split(key, 512))

    def nrm(shape, scale=0.02):
        return jax.random.normal(next(keys), shape, jnp.float32) * scale

    def unif(shape):
        return jax.random.uniform(next(keys), shape, jnp.float32)

    bf = lambda x: x.astype(BF16)            # matmul weights / embedding stored in bf16

    params = {
        'emb': bf(nrm((vocab, C), 0.5)),
        'ln_out_w': jnp.ones((C,), jnp.float32),
        'ln_out_b': jnp.zeros((C,), jnp.float32),
        'head': bf(nrm((C, vocab), 0.1)),
        'blocks': [],
    }
    for l in range(n_layer):
        att = {
            'x_r': unif((1, 1, C)), 'x_w': unif((1, 1, C)), 'x_k': unif((1, 1, C)),
            'x_v': unif((1, 1, C)), 'x_a': unif((1, 1, C)), 'x_g': unif((1, 1, C)),
            'w0': nrm((1, 1, C), 0.5) - 4.0,
            'w1': bf(nrm((C, d_lora))), 'w2': bf(nrm((d_lora, C), 0.1)),
            'a0': nrm((1, 1, C), 0.1),
            'a1': bf(nrm((C, d_lora))), 'a2': bf(nrm((d_lora, C), 0.1)),
            'v0': nrm((1, 1, C), 0.1),
            'v1': bf(nrm((C, d_lora))), 'v2': bf(nrm((d_lora, C), 0.1)),
            'g1': bf(nrm((C, d_lora))), 'g2': bf(nrm((d_lora, C), 0.1)),
            'k_k': jnp.full((1, 1, C), 0.85, jnp.float32),
            'k_a': jnp.ones((1, 1, C), jnp.float32),
            'r_k': nrm((H, N), 0.1),
            'Wr': bf(nrm((C, C), 0.1)), 'Wk': bf(nrm((C, C), 0.1)),
            'Wv': bf(nrm((C, C), 0.1)), 'Wo': bf(nrm((C, C), 0.1)),
            'ln_x_w': jnp.ones((C,), jnp.float32),
            'ln_x_b': jnp.zeros((C,), jnp.float32),
        }
        ffn = {
            'x_k': unif((1, 1, C)),
            'Wk': bf(nrm((C, dim_ffn), 0.1)),
            'Wv': bf(nrm((dim_ffn, C), 0.1)),
        }
        blk = {
            'att': att, 'ffn': ffn,
            'ln1_w': jnp.ones((C,), jnp.float32), 'ln1_b': jnp.zeros((C,), jnp.float32),
            'ln2_w': jnp.ones((C,), jnp.float32), 'ln2_b': jnp.zeros((C,), jnp.float32),
        }
        if l == 0:
            blk['ln0_w'] = jnp.ones((C,), jnp.float32)
            blk['ln0_b'] = jnp.zeros((C,), jnp.float32)
        params['blocks'].append(blk)
    return params


if __name__ == "__main__":
    B, T = 2, 8
    vocab, C, head_size, n_layer = 64, 32, 16, 2
    H = C // head_size
    dim_ffn = int(C * 3.5 // 32 * 32)                        # matches torch formula -> 96

    key = jax.random.PRNGKey(0)
    pkey, ikey = jax.random.split(key)
    params = init_params(pkey, n_layer, vocab, C, H, head_size, dim_ffn)
    idx = jax.random.randint(ikey, (B, T), 0, vocab)

    logits = rwkv_forward(params, idx, H, head_size)
    logits = jax.block_until_ready(logits)
    assert logits.shape == (B, T, vocab)
    assert bool(jnp.all(jnp.isfinite(logits.astype(jnp.float32))))
    print("KERNEL_OK")
</pallas_src>

<mosaic_0001>
module attributes {stable_mosaic.version = 11 : i64} {
  func.func @_ln_kernel(%arg0: i32, %arg1: memref<16x32xbf16, #tpu.memory_space<vmem>>, %arg2: memref<1x32xf32, #tpu.memory_space<vmem>>, %arg3: memref<1x32xf32, #tpu.memory_space<vmem>>, %arg4: memref<16x32xbf16, #tpu.memory_space<vmem>>) attributes {dimension_semantics = [#tpu.dimension_semantics<parallel>], iteration_bounds = array<i64: 1>, scalar_prefetch = 0 : i64, scratch_operands = 0 : i64, tpu.core_type = #tpu.core_type<tc>, window_params = [{transform_indices = @transform_0, window_bounds = array<i64: 16, 32>}, {pipeline_mode = #tpu.pipeline_mode<synchronous>, transform_indices = @transform_1, window_bounds = array<i64: 1, 32>}, {pipeline_mode = #tpu.pipeline_mode<synchronous>, transform_indices = @transform_2, window_bounds = array<i64: 1, 32>}, {transform_indices = @transform_3, window_bounds = array<i64: 16, 32>}]} {
    %c0 = arith.constant 0 : index
    %c0_0 = arith.constant 0 : index
    %0 = vector.load %arg1[%c0, %c0_0] : memref<16x32xbf16, #tpu.memory_space<vmem>>, vector<16x32xbf16>
    %1 = arith.extf %0 : vector<16x32xbf16> to vector<16x32xf32>
    %cst = arith.constant dense<0.000000e+00> : vector<16xf32>
    %2 = vector.multi_reduction <add>, %1, %cst [1] : vector<16x32xf32> to vector<16xf32>
    %3 = vector.shape_cast %2 : vector<16xf32> to vector<16x1xf32>
    %cst_1 = arith.constant 3.200000e+01 : f32
    %4 = vector.broadcast %cst_1 : f32 to vector<16x1xf32>
    %5 = arith.divf %3, %4 : vector<16x1xf32>
    %6 = vector.broadcast %5 : vector<16x1xf32> to vector<16x32xf32>
    %7 = arith.subf %1, %6 : vector<16x32xf32>
    %8 = arith.mulf %7, %7 : vector<16x32xf32>
    %cst_2 = arith.constant dense<0.000000e+00> : vector<16xf32>
    %9 = vector.multi_reduction <add>, %8, %cst_2 [1] : vector<16x32xf32> to vector<16xf32>
    %10 = vector.shape_cast %9 : vector<16xf32> to vector<16x1xf32>
    %cst_3 = arith.constant 3.200000e+01 : f32
    %11 = vector.broadcast %cst_3 : f32 to vector<16x1xf32>
    %12 = arith.divf %10, %11 : vector<16x1xf32>
    %cst_4 = arith.constant 9.99999974E-6 : f32
    %13 = vector.broadcast %cst_4 : f32 to vector<16x1xf32>
    %14 = arith.addf %12, %13 : vector<16x1xf32>
    %15 = math.rsqrt %14 : vector<16x1xf32>
    %16 = vector.broadcast %15 : vector<16x1xf32> to vector<16x32xf32>
    %17 = arith.mulf %7, %16 : vector<16x32xf32>
    %c0_5 = arith.constant 0 : index
    %c0_6 = arith.constant 0 : index
    %18 = vector.load %arg2[%c0_5, %c0_6] : memref<1x32xf32, #tpu.memory_space<vmem>>, vector<1x32xf32>
    %19 = vector.broadcast %18 : vector<1x32xf32> to vector<16x32xf32>
    %20 = arith.mulf %17, %19 : vector<16x32xf32>
    %c0_7 = arith.constant 0 : index
    %c0_8 = arith.constant 0 : index
    %21 = vector.load %arg3[%c0_7, %c0_8] : memref<1x32xf32, #tpu.memory_space<vmem>>, vector<1x32xf32>
    %22 = vector.broadcast %21 : vector<1x32xf32> to vector<16x32xf32>
    %23 = arith.addf %20, %22 : vector<16x32xf32>
    %24 = arith.truncf %23 : vector<16x32xf32> to vector<16x32xbf16>
    %c0_9 = arith.constant 0 : index
    %c0_10 = arith.constant 0 : index
    %25 = vector.load %arg4[%c0_9, %c0_10] : memref<16x32xbf16, #tpu.memory_space<vmem>>, vector<16x32xbf16>
    tpu.vector_store %arg4[%c0_9, %c0_10], %24 {strides = array<i32>} : memref<16x32xbf16, #tpu.memory_space<vmem>>, vector<16x32xbf16>,
    return
  }
  func.func @transform_0(%arg0: i32) -> (i32, i32) {
    %c0_i32 = arith.constant 0 : i32
    %c0_i32_0 = arith.constant 0 : i32
    return %arg0, %c0_i32 : i32, i32
  }
  func.func @transform_1(%arg0: i32) -> (i32, i32) {
    %c0_i32 = arith.constant 0 : i32
    %c0_i32_0 = arith.constant 0 : i32
    %c0_i32_1 = arith.constant 0 : i32
    return %c0_i32, %c0_i32_0 : i32, i32
  }
  func.func @transform_2(%arg0: i32) -> (i32, i32) {
    %c0_i32 = arith.constant 0 : i32
    %c0_i32_0 = arith.constant 0 : i32
    %c0_i32_1 = arith.constant 0 : i32
    return %c0_i32, %c0_i32_0 : i32, i32
  }
  func.func @transform_3(%arg0: i32) -> (i32, i32) {
    %c0_i32 = arith.constant 0 : i32
    %c0_i32_0 = arith.constant 0 : i32
    return %arg0, %c0_i32 : i32, i32
  }
}

</mosaic_0001>

<llo_original>
// kernel: tpu_custom_call.1
$region0: #{tpu_custom_call.1}
  #allocation0 [shape = 'u32[]', space=smem, size = 0x4, offset = 0x4, fixed_abs, tag = 'smem constant byte address 0x4 - core index']
  #allocation1 [shape = 'u32[144,128]{1,0:T(1,128)}', space=vmem, size = 0x12000, scoped, tag = 'internal scratch']
  %s0 = inlined_call_operand.hbm [shape: bf16[16,32], index: 0, kind: input, shape index: {}]
  %s1 = inlined_call_operand.vmem [shape: f32[1,32], index: 1, kind: input, shape index: {}]
  %s2 = inlined_call_operand.vmem [shape: f32[1,32], index: 2, kind: input, shape index: {}]
  %s3 = inlined_call_operand.hbm [shape: bf16[16,32], index: 3, kind: output, shape index: {}]
  %s4 = sld [smem:[#allocation0]]
  $region26: #{tpu_custom_call.1} parent=0
    _
  %s6 = ssub.s32 1, %s4
  %s7 = scalar_select 0, %s6, %s4
  $region1: #{tpu_custom_call.1} parent=0
    #allocation2 [shape = 'u8[4096]{0}', space=vmem, size = 0x1000, scoped, tag = 'input window, operand 0, single buffered']
    #allocation3 [shape = 's32[1]{0}', space=sflag, size = 0x4, scoped, tag = 'scoped memory for tpu_custom_call.1']
    #allocation4 [shape = 's32[1]{0}', space=sflag, size = 0x4, scoped, tag = 'scoped memory for tpu_custom_call.1']
    #allocation5 [shape = 'u8[4096]{0}', space=vmem, size = 0x1000, scoped, tag = 'output window, operand 0, single buffered']
    %8 = vsyncpa [#allocation3], 0
    %9 = vsyncpa [#allocation4], 0
    // Predicated region
    $region2: #{tpu_custom_call.1} parent=1 // pred_check
      _
    $region3: #{tpu_custom_call.1} parent=1 // pred_check_branch
      %11 = sbr.rel (0) target = $region5
    $region4: #{tpu_custom_call.1} parent=1 // pred_region
      %s13 = ssub.s32 128, 128
      %14 = vsyncadd [#allocation3], %s13
      %s15 = sshll.u32 [#allocation2], 4
      %s16 = int_to_ptr.vmem [resolvable:$true] %s15
      %21 = dma.hbm_to_vmem [thread:$0]  %s0, 128, %s16, [#allocation3], 64, 64, 4
    $region5: #{tpu_custom_call.1} parent=1 // pred_fallthru
      _
    // Predicated region
    $region6: #{tpu_custom_call.1} parent=1 // pred_check
      _
    $region7: #{tpu_custom_call.1} parent=1 // pred_check_branch
      %23 = sbr.rel (0) target = $region9
    $region8: #{tpu_custom_call.1} parent=1 // pred_region
      _
    $region9: #{tpu_custom_call.1} parent=1 // pred_fallthru
      _
    // Predicated region
    $region10: #{tpu_custom_call.1} parent=1 // pred_check
      _
    $region11: #{tpu_custom_call.1} parent=1 // pred_check_branch
      %25 = sbr.rel (0) target = $region13
    $region12: #{tpu_custom_call.1} parent=1 // pred_region
      _
    $region13: #{tpu_custom_call.1} parent=1 // pred_fallthru
      _
    // Predicated region
    $region14: #{tpu_custom_call.1} parent=1 // pred_check
      _
    $region15: #{tpu_custom_call.1} parent=1 // pred_check_branch
      %27 = sbr.rel (0) target = $region17
    $region16: #{tpu_custom_call.1} parent=1 // pred_region
      %28 = dma.done [#allocation3], 128
    $region17: #{tpu_custom_call.1} parent=1 // pred_fallthru
      _
    %v29 = vld [vmem:[#allocation2] sm:$0xf]
    %v30 = vld [vmem:[#allocation2 + $0x4] sm:$0xf]
    %v31 = vunpack.c.l.bf16 %v29
    %v32 = vunpack.c.l.bf16 %v30
    %vm33 = vcmask 261120
    %v34 = vsel %vm33, %v31, 0.0
    %35 = vadd.xlane.f32.xlu0 %v34
    %v36 = vpop.xlane.xlu0 %35
    %v37 = vsel %vm33, %v32, 0.0
    %38 = vadd.xlane.f32.xlu0 %v37
    %v39 = vpop.xlane.xlu0 %38
    %v40 = vrcp.pop 32.0
    %v41 = vmul.f32 %v36, %v40
    %v42 = vmul.f32 %v39, %v40
    %v43 = vsub.f32 %v31, %v41
    %v44 = vsub.f32 %v32, %v42
    %v45 = vmul.f32 %v43, %v43
    %v46 = vmul.f32 %v44, %v44
    %v47 = vsel %vm33, %v45, 0.0
    %48 = vadd.xlane.f32.xlu0 %v47
    %v49 = vpop.xlane.xlu0 %48
    %v50 = vsel %vm33, %v46, 0.0
    %51 = vadd.xlane.f32.xlu0 %v50
    %v52 = vpop.xlane.xlu0 %51
    %v53 = vmul.f32 %v49, %v40
    %v54 = vmul.f32 %v52, %v40
    %v55 = vadd.f32 %v53, 1e-05
    %v56 = vadd.f32 %v54, 1e-05
    %v57 = vrsqrt.pop %v55
    %v58 = vrsqrt.pop %v56
    %v59 = vmul.f32 %v43, %v57
    %v60 = vmul.f32 %v44, %v58
    %v61 = vld [vmem:[%s1] sm:$0x1]
    %v63 = vlaneseq
    %v64 = vshrl.u32 %v63, 7
    %v65 = vsub.s32 0, %v64
    %v66 = vrot.slane %v61, %v65
    %v68 = vmul.f32 %v59, %v66
    %v69 = vmul.f32 %v60, %v66
    %v70 = vld [vmem:[%s2] sm:$0x1]
    %v72 = vlaneseq
    %v73 = vshrl.u32 %v72, 7
    %v74 = vsub.s32 0, %v73
    %v75 = vrot.slane %v70, %v74
    %v77 = vadd.f32 %v68, %v75
    %v78 = vadd.f32 %v69, %v75
    %v79 = vpack.c.bf16 %v78, %v77
    %v81 = vunpack.c.l.b16 %v79
    %v82 = vunpack.c.h.b16 %v79
    %v83 = vpack.c.b16 %v81, %v81
    %v84 = vpack.c.b16 %v82, %v82
    %vm87 = vcmask 257024
    %88 = vst.msk [vmem:[#allocation5] sm:$0xf] %vm87, %v83
    %89 = vst.msk [vmem:[#allocation5 + $0x4] sm:$0xf] %vm87, %v84
    // Predicated region
    $region18: #{tpu_custom_call.1} parent=1 // pred_check
      _
    $region19: #{tpu_custom_call.1} parent=1 // pred_check_branch
      %91 = sbr.rel (0) target = $region21
    $region20: #{tpu_custom_call.1} parent=1 // pred_region
      %s93 = ssub.s32 128, 128
      %94 = vsyncadd [#allocation4], %s93
      %s95 = sshll.u32 [#allocation5], 4
      %s96 = int_to_ptr.vmem [resolvable:$true] %s95
      %101 = dma.vmem_to_hbm [thread:$0]  %s96, 128, %s3, [#allocation4], 64, 64, 4
    $region21: #{tpu_custom_call.1} parent=1 // pred_fallthru
      _
    // Predicated region
    $region22: #{tpu_custom_call.1} parent=1 // pred_check
      _
    $region23: #{tpu_custom_call.1} parent=1 // pred_check_branch
      %103 = sbr.rel (0) target = $region25
    $region24: #{tpu_custom_call.1} parent=1 // pred_region
      %104 = dma.done [#allocation4], 128
    $region25: #{tpu_custom_call.1} parent=1 // pred_fallthru
      _
    %105 = vsyncpa [#allocation3], 1
    %106 = vsyncpa [#allocation4], 1

</llo_original>
